<compile_context>
chip_gen: v6e
topology: v6e:2x2x1
jax: 0.10.0
libtpu: 0.0.40
codegen_flags: <defaults>
</compile_context>

<pallas_src>
import jax
import jax.numpy as jnp
from jax.experimental import pallas as pl
from jax.experimental.pallas import tpu as pltpu

IN_FEATURES = 5
OUT_FEATURES = 10

PACK = 8                          # batch rows packed per sublane row
PIN = PACK * IN_FEATURES          # 40  (packed input width)
POUT = PACK * OUT_FEATURES        # 80  (packed output width)

_LANE = 128
_SUBLANE = 8
# Max packed rows per tile: keeps the double-buffered, lane-padded block
# footprint (~2 KiB / packed row) under ~20 MiB -> safe on v5e/v6e/v7x.
_MAX_TILE_ROWS = 8192


def _round_up(v, m):
    return ((v + m - 1) // m) * m


def linear_packed_kernel(x_ref, w_ref, b_ref, o_ref):
    # x_ref: (tb, 40)   w_ref: (40, 80) block-diag kron(eye(8), W^T)
    # b_ref: (1, 80)    o_ref: (tb, 80)
    acc = jnp.dot(x_ref[...], w_ref[...], preferred_element_type=jnp.float32)
    o_ref[...] = (acc + b_ref[...]).astype(o_ref.dtype)


def linear_pallas(x, weight, bias, *, tile_rows=4096):
    """nn.Linear(5, 10) forward.

    x: (B, IN) f32; weight: (OUT, IN) f32 (PyTorch layout); bias: (OUT,) f32.
    """
    B, in_f = x.shape
    assert in_f == IN_FEATURES
    assert weight.shape == (OUT_FEATURES, IN_FEATURES)
    assert bias.shape == (OUT_FEATURES,)

    # --- wrapper-side packing (free views + tiny constant operands) ---------
    Bp = _round_up(B, PACK)
    if Bp != B:
        x = jnp.pad(x, ((0, Bp - B), (0, 0)))        # zero-pad ragged batch
    n_rows = Bp // PACK

    x_packed = x.reshape(n_rows, PIN)                             # (B/8, 40)
    w_blk = jnp.kron(jnp.eye(PACK, dtype=weight.dtype), weight.T)  # (40, 80)
    b_packed = jnp.tile(bias, PACK).reshape(1, POUT)               # (1, 80)

    # --- tile selection ------------------------------------------------------
    tile_rows = min(int(tile_rows), _MAX_TILE_ROWS)
    if n_rows > tile_rows:
        tb = tile_rows                                   # multiple of 8
    elif n_rows >= 2 * _SUBLANE:
        # Split into >= 2 grid steps so the "parallel" axis can use both TCs.
        tb = _round_up((n_rows + 1) // 2, _SUBLANE)
    else:
        tb = n_rows                                      # full-extent block
    grid = (pl.cdiv(n_rows, tb),)

    # --- explicit scoped-VMEM budget from the lane-padded block footprint ---
    x_blk_bytes = tb * _round_up(PIN, _LANE) * 4
    o_blk_bytes = tb * _round_up(POUT, _LANE) * 4
    w_buf_bytes = _round_up(PIN, _SUBLANE) * _round_up(POUT, _LANE) * 4
    b_buf_bytes = _SUBLANE * _LANE * 4
    vmem_limit = 2 * (x_blk_bytes + o_blk_bytes + w_buf_bytes + b_buf_bytes) \
        + (2 << 20)                                      # 2 MiB headroom
    vmem_limit = max(vmem_limit, 4 << 20)

    itemsize = 4
    flops = 2 * n_rows * PIN * POUT
    bytes_accessed = (x_packed.size + w_blk.size + b_packed.size
                      + n_rows * POUT) * itemsize

    out_packed = pl.pallas_call(
        linear_packed_kernel,
        out_shape=jax.ShapeDtypeStruct((n_rows, POUT), x.dtype),
        grid=grid,
        in_specs=[
            # Streamed packed-activation tile (double-buffered by Pallas).
            pl.BlockSpec((tb, PIN), lambda i: (i, 0)),
            # Tiny weight / bias: constant index_map -> VMEM-resident.
            pl.BlockSpec((PIN, POUT), lambda i: (0, 0)),
            pl.BlockSpec((1, POUT), lambda i: (0, 0)),
        ],
        out_specs=pl.BlockSpec((tb, POUT), lambda i: (i, 0)),
        compiler_params=pltpu.CompilerParams(
            dimension_semantics=("parallel",),
            vmem_limit_bytes=vmem_limit),
        cost_estimate=pl.CostEstimate(
            flops=flops, transcendentals=0, bytes_accessed=bytes_accessed),
    )(x_packed, w_blk, b_packed)

    out = out_packed.reshape(Bp, OUT_FEATURES)           # free view
    if Bp != B:
        out = out[:B]
    return out


if __name__ == "__main__":
    key = jax.random.PRNGKey(0)
    kx, kw, kb = jax.random.split(key, 3)

    B = 2
    x = jax.random.normal(kx, (B, IN_FEATURES), dtype=jnp.float32)
    # Deterministic parameter init (shapes from nn.Linear(5, 10)):
    # weight: (out_features, in_features), bias: (out_features,)
    bound = 1.0 / (IN_FEATURES ** 0.5)
    weight = jax.random.uniform(
        kw, (OUT_FEATURES, IN_FEATURES), minval=-bound, maxval=bound,
        dtype=jnp.float32)
    bias = jax.random.uniform(
        kb, (OUT_FEATURES,), minval=-bound, maxval=bound, dtype=jnp.float32)

    out = linear_pallas(x, weight, bias)
    jax.block_until_ready(out)

    # Correctness check against plain JAX reference of nn.Linear semantics.
    ref = x @ weight.T + bias
    assert out.shape == (B, OUT_FEATURES)
    assert jnp.allclose(out, ref, atol=1e-5, rtol=1e-5)

    # Also exercise a larger, ragged batch (checks padding + multi-step grid).
    B2 = 1037
    x2 = jax.random.normal(jax.random.PRNGKey(1), (B2, IN_FEATURES),
                           dtype=jnp.float32)
    out2 = linear_pallas(x2, weight, bias)
    jax.block_until_ready(out2)
    ref2 = x2 @ weight.T + bias
    assert out2.shape == (B2, OUT_FEATURES)
    assert jnp.allclose(out2, ref2, atol=1e-5, rtol=1e-5)

    print("KERNEL_OK")
</pallas_src>

<mosaic_0001>
module attributes {stable_mosaic.version = 11 : i64} {
  func.func @linear_packed_kernel(%arg0: i32, %arg1: memref<1x40xf32, #tpu.memory_space<vmem>>, %arg2: memref<40x80xf32, #tpu.memory_space<vmem>>, %arg3: memref<1x80xf32, #tpu.memory_space<vmem>>, %arg4: memref<1x80xf32, #tpu.memory_space<vmem>>) attributes {dimension_semantics = [#tpu.dimension_semantics<parallel>], iteration_bounds = array<i64: 1>, scalar_prefetch = 0 : i64, scratch_operands = 0 : i64, tpu.core_type = #tpu.core_type<tc>, window_params = [{transform_indices = @transform_0, window_bounds = array<i64: 1, 40>}, {pipeline_mode = #tpu.pipeline_mode<synchronous>, transform_indices = @transform_1, window_bounds = array<i64: 40, 80>}, {pipeline_mode = #tpu.pipeline_mode<synchronous>, transform_indices = @transform_2, window_bounds = array<i64: 1, 80>}, {transform_indices = @transform_3, window_bounds = array<i64: 1, 80>}]} {
    %c0 = arith.constant 0 : index
    %c0_0 = arith.constant 0 : index
    %0 = vector.load %arg1[%c0, %c0_0] : memref<1x40xf32, #tpu.memory_space<vmem>>, vector<1x40xf32>
    %c0_1 = arith.constant 0 : index
    %c0_2 = arith.constant 0 : index
    %1 = vector.load %arg2[%c0_1, %c0_2] : memref<40x80xf32, #tpu.memory_space<vmem>>, vector<40x80xf32>
    %cst = arith.constant dense<0.000000e+00> : vector<1x80xf32>
    %2 = tpu.matmul %0, %1, %cst {dimension_numbers = #tpu.dot_dimension_numbers<[1], [0], [0], [1], [0, 0, 1, 1], [], []>} : vector<1x40xf32>, vector<40x80xf32>, vector<1x80xf32> -> vector<1x80xf32>
    %c0_3 = arith.constant 0 : index
    %c0_4 = arith.constant 0 : index
    %3 = vector.load %arg3[%c0_3, %c0_4] : memref<1x80xf32, #tpu.memory_space<vmem>>, vector<1x80xf32>
    %4 = arith.addf %2, %3 : vector<1x80xf32>
    %c0_5 = arith.constant 0 : index
    %c0_6 = arith.constant 0 : index
    %5 = vector.load %arg4[%c0_5, %c0_6] : memref<1x80xf32, #tpu.memory_space<vmem>>, vector<1x80xf32>
    tpu.vector_store %arg4[%c0_5, %c0_6], %4 {strides = array<i32>} : memref<1x80xf32, #tpu.memory_space<vmem>>, vector<1x80xf32>,
    return
  }
  func.func @transform_0(%arg0: i32) -> (i32, i32) {
    %c0_i32 = arith.constant 0 : i32
    %c0_i32_0 = arith.constant 0 : i32
    return %arg0, %c0_i32 : i32, i32
  }
  func.func @transform_1(%arg0: i32) -> (i32, i32) {
    %c0_i32 = arith.constant 0 : i32
    %c0_i32_0 = arith.constant 0 : i32
    %c0_i32_1 = arith.constant 0 : i32
    return %c0_i32, %c0_i32_0 : i32, i32
  }
  func.func @transform_2(%arg0: i32) -> (i32, i32) {
    %c0_i32 = arith.constant 0 : i32
    %c0_i32_0 = arith.constant 0 : i32
    %c0_i32_1 = arith.constant 0 : i32
    return %c0_i32, %c0_i32_0 : i32, i32
  }
  func.func @transform_3(%arg0: i32) -> (i32, i32) {
    %c0_i32 = arith.constant 0 : i32
    %c0_i32_0 = arith.constant 0 : i32
    return %arg0, %c0_i32 : i32, i32
  }
}

</mosaic_0001>

<llo_original>
// kernel: tpu_custom_call.1
$region0: #{tpu_custom_call.1}
  #allocation0 [shape = 'u32[]', space=smem, size = 0x4, offset = 0x4, fixed_abs, tag = 'smem constant byte address 0x4 - core index']
  #allocation1 [shape = 'u32[144,128]{1,0:T(1,128)}', space=vmem, size = 0x12000, scoped, tag = 'internal scratch']
  %s0 = inlined_call_operand.hbm [shape: f32[1,40], index: 0, kind: input, shape index: {}]
  %s1 = inlined_call_operand.hbm [shape: f32[40,80], index: 1, kind: input, shape index: {}]
  %s2 = inlined_call_operand.vmem [shape: f32[1,80], index: 2, kind: input, shape index: {}]
  %s3 = inlined_call_operand.hbm [shape: f32[1,80], index: 3, kind: output, shape index: {}]
  %s4 = sld [smem:[#allocation0]]
  $region30: #{tpu_custom_call.1} parent=0
    _
  %s6 = ssub.s32 1, %s4
  %s7 = scalar_select 0, %s6, %s4
  $region1: #{tpu_custom_call.1} parent=0
    #allocation2 [shape = 'u8[512]{0}', space=vmem, size = 0x400, scoped, tag = 'input window, operand 0, single buffered']
    #allocation3 [shape = 's32[1]{0}', space=sflag, size = 0x4, scoped, tag = 'scoped memory for tpu_custom_call.1']
    #allocation4 [shape = 's32[1]{0}', space=sflag, size = 0x4, scoped, tag = 'scoped memory for tpu_custom_call.1']
    #allocation5 [shape = 'u8[20480]{0}', space=vmem, size = 0x5000, scoped, tag = 'input window, operand 1, single buffered']
    #allocation6 [shape = 's32[1]{0}', space=sflag, size = 0x4, scoped, tag = 'scoped memory for tpu_custom_call.1']
    #allocation7 [shape = 'u8[512]{0}', space=vmem, size = 0x400, scoped, tag = 'output window, operand 0, single buffered']
    %8 = vsyncpa [#allocation3], 0
    %9 = vsyncpa [#allocation6], 0
    %10 = vsyncpa [#allocation4], 0
    // Predicated region
    $region2: #{tpu_custom_call.1} parent=1 // pred_check
      _
    $region3: #{tpu_custom_call.1} parent=1 // pred_check_branch
      %12 = sbr.rel (0) target = $region5
    $region4: #{tpu_custom_call.1} parent=1 // pred_region
      %s14 = ssub.s32 16, 16
      %15 = vsyncadd [#allocation3], %s14
      %s17 = sshll.u32 [#allocation2], 4
      %s18 = int_to_ptr.vmem [resolvable:$true] %s17
      %20 = dma.hbm_to_vmem [thread:$0]  %s0, 16, %s18, [#allocation3]
    $region5: #{tpu_custom_call.1} parent=1 // pred_fallthru
      _
    // Predicated region
    $region6: #{tpu_custom_call.1} parent=1 // pred_check
      _
    $region7: #{tpu_custom_call.1} parent=1 // pred_check_branch
      %22 = sbr.rel (0) target = $region9
    $region8: #{tpu_custom_call.1} parent=1 // pred_region
      %s24 = ssub.s32 640, 640
      %25 = vsyncadd [#allocation6], %s24
      %s26 = sshll.u32 [#allocation5], 4
      %s27 = int_to_ptr.vmem [resolvable:$true] %s26
      %32 = dma.hbm_to_vmem [thread:$0]  %s1, 640, %s27, [#allocation6], 128, 128, 8
    $region9: #{tpu_custom_call.1} parent=1 // pred_fallthru
      _
    // Predicated region
    $region10: #{tpu_custom_call.1} parent=1 // pred_check
      _
    $region11: #{tpu_custom_call.1} parent=1 // pred_check_branch
      %34 = sbr.rel (0) target = $region13
    $region12: #{tpu_custom_call.1} parent=1 // pred_region
      _
    $region13: #{tpu_custom_call.1} parent=1 // pred_fallthru
      _
    // Predicated region
    $region14: #{tpu_custom_call.1} parent=1 // pred_check
      _
    $region15: #{tpu_custom_call.1} parent=1 // pred_check_branch
      %36 = sbr.rel (0) target = $region17
    $region16: #{tpu_custom_call.1} parent=1 // pred_region
      %37 = dma.done [#allocation3], 16
    $region17: #{tpu_custom_call.1} parent=1 // pred_fallthru
      _
    // Predicated region
    $region18: #{tpu_custom_call.1} parent=1 // pred_check
      _
    $region19: #{tpu_custom_call.1} parent=1 // pred_check_branch
      %39 = sbr.rel (0) target = $region21
    $region20: #{tpu_custom_call.1} parent=1 // pred_region
      %40 = dma.done [#allocation6], 640
    $region21: #{tpu_custom_call.1} parent=1 // pred_fallthru
      _
    %v41 = vld [vmem:[#allocation2] sm:$0x1]
    %v42 = vld [vmem:[#allocation5] sm:$0xff]
    %v43 = vld [vmem:[#allocation5 + $0x8] sm:$0xff]
    %v44 = vld [vmem:[#allocation5 + $0x10] sm:$0xff]
    %v45 = vld [vmem:[#allocation5 + $0x18] sm:$0xff]
    %v46 = vld [vmem:[#allocation5 + $0x20] sm:$0xff]
    %v47 = vld [vmem:[%s2] sm:$0x1]
    %vm48 = vcmask 326656
    %v50 = vsel %vm48, %v41, 0
    %52 = vmatprep.subr.mxu0 0.0
    %53 = vmatpush1.msra.mxu0 0.0
    %54 = vmatprep.subr.mxu0 0.0
    %55 = vmatpush1.msra.mxu0 0.0
    %56 = vmatprep.subr.mxu0 0.0
    %57 = vmatpush1.msra.mxu0 0.0
    %58 = vmatprep.subr.mxu0 0.0
    %59 = vmatpush1.msra.mxu0 0.0
    %60 = vmatprep.subr.mxu0 0.0
    %61 = vmatpush1.msra.mxu0 0.0
    %62 = vmatprep.subr.mxu0 0.0
    %63 = vmatpush1.msra.mxu0 0.0
    %64 = vmatprep.subr.mxu0 0.0
    %65 = vmatpush1.msra.mxu0 0.0
    %66 = vmatprep.subr.mxu0 0.0
    %67 = vmatpush1.msra.mxu0 0.0
    %68 = vmatprep.subr.mxu0 0.0
    %69 = vmatpush1.msra.mxu0 0.0
    %70 = vmatprep.subr.mxu0 0.0
    %71 = vmatpush1.msra.mxu0 0.0
    %72 = vmatprep.subr.mxu0 0.0
    %73 = vmatpush1.msra.mxu0 0.0
    %74 = vmatprep.subr.mxu0 0.0
    %75 = vmatpush1.msra.mxu0 %v46
    %76 = vmatprep.subr.mxu0 0.0
    %77 = vmatpush1.msra.mxu0 %v45
    %78 = vmatprep.subr.mxu0 0.0
    %79 = vmatpush1.msra.mxu0 %v44
    %80 = vmatprep.subr.mxu0 0.0
    %81 = vmatpush1.msra.mxu0 %v43
    %82 = vmatprep.subr.mxu0 0.0
    %83 = vmatpush1.msra.mxu0 %v42
    %84 = vmatprep.subr.mxu0 0.0
    %85 = vmatpush2.msra.mxu0 0.0
    %86 = vmatprep.subr.mxu0 0.0
    %87 = vmatpush2.msra.mxu0 0.0
    %88 = vmatprep.subr.mxu0 0.0
    %89 = vmatpush2.msra.mxu0 0.0
    %90 = vmatprep.subr.mxu0 0.0
    %91 = vmatpush2.msra.mxu0 0.0
    %92 = vmatprep.subr.mxu0 0.0
    %93 = vmatpush2.msra.mxu0 0.0
    %94 = vmatprep.subr.mxu0 0.0
    %95 = vmatpush2.msra.mxu0 0.0
    %96 = vmatprep.subr.mxu0 0.0
    %97 = vmatpush2.msra.mxu0 0.0
    %98 = vmatprep.subr.mxu0 0.0
    %99 = vmatpush2.msra.mxu0 0.0
    %100 = vmatprep.subr.mxu0 0.0
    %101 = vmatpush2.msra.mxu0 0.0
    %102 = vmatprep.subr.mxu0 0.0
    %103 = vmatpush2.msra.mxu0 0.0
    %104 = vmatprep.subr.mxu0 0.0
    %105 = vmatpush2.msra.mxu0 0.0
    %106 = vmatprep.subr.mxu0 0.0
    %107 = vmatpush2.msra.mxu0 0.0
    %108 = vmatprep.subr.mxu0 0.0
    %109 = vmatpush2.msra.mxu0 0.0
    %110 = vmatprep.subr.mxu0 0.0
    %111 = vmatpush2.msra.mxu0 0.0
    %112 = vmatprep.subr.mxu0 0.0
    %113 = vmatpush2.msra.mxu0 0.0
    %114 = vmatprep.subr.mxu0 0.0
    %115 = vmatpush2.msra.mxu0 0.0
    %116 = vmatprep.mubr.f32.mxu0 0.0
    %117 = vmatmul.mubr.f32.gmra.mxu0 %v50
    %v118 = vpop.f32.mrf.mxu0
    %v119 = vadd.f32 %v47, %v118
    %v120 = vpop.f32.mrf.mxu0
    %121 = vdwg.mxu0
    %vm122 = vcmask 647168
    %123 = vst.msk [vmem:[#allocation7] sm:$0x1] %vm122, %v119
    // Predicated region
    $region22: #{tpu_custom_call.1} parent=1 // pred_check
      _
    $region23: #{tpu_custom_call.1} parent=1 // pred_check_branch
      %125 = sbr.rel (0) target = $region25
    $region24: #{tpu_custom_call.1} parent=1 // pred_region
      %s127 = ssub.s32 16, 16
      %128 = vsyncadd [#allocation4], %s127
      %s130 = sshll.u32 [#allocation7], 4
      %s131 = int_to_ptr.vmem [resolvable:$true] %s130
      %133 = dma.vmem_to_hbm [thread:$0]  %s131, 16, %s3, [#allocation4]
    $region25: #{tpu_custom_call.1} parent=1 // pred_fallthru
      _
    // Predicated region
    $region26: #{tpu_custom_call.1} parent=1 // pred_check
      _
    $region27: #{tpu_custom_call.1} parent=1 // pred_check_branch
      %135 = sbr.rel (0) target = $region29
    $region28: #{tpu_custom_call.1} parent=1 // pred_region
      %136 = dma.done [#allocation4], 16
    $region29: #{tpu_custom_call.1} parent=1 // pred_fallthru
      _
    %137 = vsyncpa [#allocation3], 1
    %138 = vsyncpa [#allocation6], 1
    %139 = vsyncpa [#allocation4], 1

</llo_original>
